<compile_context>
chip_gen: v5e
topology: v5e:2x2
jax: 0.10.0
libtpu: 0.0.40
codegen_flags: <defaults>
</compile_context>

<pallas_src>
import functools

import jax
import jax.numpy as jnp
from jax.experimental import pallas as pl
from jax.experimental.pallas import tpu as pltpu

BN_EPS = 1e-5

# Whole-array operands pinned in VMEM; no grid, no index_map.
_VMEM_SPEC = pl.BlockSpec(memory_space=pltpu.MemorySpace.VMEM)


def _make_fused_mlp_kernel(n_layers, batch, last_activation):
    """Build a fused kernel for a fixed layer structure.

    Kernel ref order: (x, per-layer params..., out) where BN layers contribute
    (W, gamma, beta) and a trailing plain-linear layer contributes (W, b).
    """
    inv_b = 1.0 / float(batch)

    def kernel(*refs):
        out_ref = refs[-1]
        h = refs[0][...].astype(jnp.float32)
        idx = 1
        for i in range(n_layers):
            fused_bn = (i < n_layers - 1) or last_activation
            w = refs[idx][...]
            idx += 1
            h = jnp.dot(h, w, preferred_element_type=jnp.float32)
            if fused_bn:
                gamma = refs[idx][...]
                beta = refs[idx + 1][...]
                idx += 2
                # Training-mode BatchNorm1d, one-pass batch statistics
                # (biased variance). Linear bias omitted: BN cancels it exactly.
                s1 = jnp.sum(h, axis=0, keepdims=True)
                s2 = jnp.sum(h * h, axis=0, keepdims=True)
                mean = s1 * inv_b
                var = s2 * inv_b - mean * mean
                hn = (h - mean) * jax.lax.rsqrt(var + BN_EPS)
                h = jnp.maximum(hn * gamma + beta, 0.0)
            else:
                b = refs[idx][...]
                idx += 1
                h = h + b
        out_ref[...] = h.astype(out_ref.dtype)

    return kernel


@functools.partial(jax.jit, static_argnames=("last_activation",))
def mlp_forward(x, params, last_activation=True):
    """Fused Pallas forward for the whole MLP (single pallas_call)."""
    n = len(params)
    B = x.shape[0]
    dout = params[-1][0].shape[1]

    flat_inputs = [x]
    for i, (w, b, gamma, beta) in enumerate(params):
        fused_bn = (i < n - 1) or last_activation
        flat_inputs.append(w)
        if fused_bn:
            # Bias is mathematically redundant before training-mode BN -> skip it.
            flat_inputs.extend([gamma, beta])
        else:
            flat_inputs.append(b)

    kernel = _make_fused_mlp_kernel(n, B, last_activation)
    return pl.pallas_call(
        kernel,
        out_shape=jax.ShapeDtypeStruct((B, dout), jnp.float32),
        in_specs=[_VMEM_SPEC] * len(flat_inputs),
        out_specs=_VMEM_SPEC,
    )(*flat_inputs)


def init_mlp_params(key, hidden_size):
    """Deterministic synthetic parameters matching nn.Linear / nn.BatchNorm1d shapes."""
    params = []
    for i in range(len(hidden_size) - 1):
        din, dout = hidden_size[i], hidden_size[i + 1]
        key, kw, kb, kg, kbeta = jax.random.split(key, 5)
        # Linear: torch weight is (dout, din); we store transposed (din, dout).
        w = jax.random.normal(kw, (din, dout), jnp.float32) * (1.0 / jnp.sqrt(din))
        b = jax.random.normal(kb, (1, dout), jnp.float32) * 0.01
        gamma = 1.0 + 0.1 * jax.random.normal(kg, (1, dout), jnp.float32)
        beta = 0.1 * jax.random.normal(kbeta, (1, dout), jnp.float32)
        params.append((w, b, gamma, beta))
    return params


def mlp_reference(x, params, last_activation=True):
    """Pure-JAX reference mirroring the PyTorch forward (training-mode BN, with bias)."""
    n = len(params)
    for i, (w, b, gamma, beta) in enumerate(params):
        h = x @ w + b
        if i < n - 1 or (i == n - 1 and last_activation):
            mean = jnp.mean(h, axis=0, keepdims=True)
            var = jnp.mean((h - mean) ** 2, axis=0, keepdims=True)
            h = (h - mean) / jnp.sqrt(var + BN_EPS)
            h = h * gamma + beta
            h = jnp.maximum(h, 0.0)
        x = h
    return x


if __name__ == "__main__":
    hidden_size = [32, 64, 48, 16]   # MLP(hidden_size=[32, 64, 48, 16])
    B = 8

    key = jax.random.PRNGKey(0)
    kx, kp = jax.random.split(key)
    x = jax.random.normal(kx, (B, hidden_size[0]), jnp.float32)
    params = init_mlp_params(kp, hidden_size)

    # last_activation=True path (all layers Linear+BN+ReLU)
    out_t = jax.block_until_ready(mlp_forward(x, params, last_activation=True))
    ref_t = mlp_reference(x, params, last_activation=True)
    assert out_t.shape == (B, hidden_size[-1])
    assert jnp.allclose(out_t, ref_t, atol=1e-4, rtol=1e-4), "mismatch (last_activation=True)"

    # last_activation=False path (final layer is a plain Linear with bias)
    out_f = jax.block_until_ready(mlp_forward(x, params, last_activation=False))
    ref_f = mlp_reference(x, params, last_activation=False)
    assert out_f.shape == (B, hidden_size[-1])
    assert jnp.allclose(out_f, ref_f, atol=1e-4, rtol=1e-4), "mismatch (last_activation=False)"

    print("KERNEL_OK")
</pallas_src>

<mosaic_0001>
module attributes {stable_mosaic.version = 11 : i64} {
  func.func @kernel(%arg0: memref<8x32xf32, #tpu.memory_space<vmem>>, %arg1: memref<32x64xf32, #tpu.memory_space<vmem>>, %arg2: memref<1x64xf32, #tpu.memory_space<vmem>>, %arg3: memref<1x64xf32, #tpu.memory_space<vmem>>, %arg4: memref<64x48xf32, #tpu.memory_space<vmem>>, %arg5: memref<1x48xf32, #tpu.memory_space<vmem>>, %arg6: memref<1x48xf32, #tpu.memory_space<vmem>>, %arg7: memref<48x16xf32, #tpu.memory_space<vmem>>, %arg8: memref<1x16xf32, #tpu.memory_space<vmem>>, %arg9: memref<1x16xf32, #tpu.memory_space<vmem>>, %arg10: memref<8x16xf32, #tpu.memory_space<vmem>>) attributes {dimension_semantics = [], scalar_prefetch = 0 : i64, scratch_operands = 0 : i64, tpu.core_type = #tpu.core_type<tc>} {
    %c0 = arith.constant 0 : index
    %c0_0 = arith.constant 0 : index
    %0 = vector.load %arg0[%c0, %c0_0] : memref<8x32xf32, #tpu.memory_space<vmem>>, vector<8x32xf32>
    %c0_1 = arith.constant 0 : index
    %c0_2 = arith.constant 0 : index
    %1 = vector.load %arg1[%c0_1, %c0_2] : memref<32x64xf32, #tpu.memory_space<vmem>>, vector<32x64xf32>
    %cst = arith.constant dense<0.000000e+00> : vector<8x64xf32>
    %2 = tpu.matmul %0, %1, %cst {dimension_numbers = #tpu.dot_dimension_numbers<[1], [0], [0], [1], [0, 0, 1, 1], [], []>} : vector<8x32xf32>, vector<32x64xf32>, vector<8x64xf32> -> vector<8x64xf32>
    %c0_3 = arith.constant 0 : index
    %c0_4 = arith.constant 0 : index
    %3 = vector.load %arg2[%c0_3, %c0_4] : memref<1x64xf32, #tpu.memory_space<vmem>>, vector<1x64xf32>
    %c0_5 = arith.constant 0 : index
    %c0_6 = arith.constant 0 : index
    %4 = vector.load %arg3[%c0_5, %c0_6] : memref<1x64xf32, #tpu.memory_space<vmem>>, vector<1x64xf32>
    %cst_7 = arith.constant dense<0.000000e+00> : vector<64xf32>
    %5 = vector.multi_reduction <add>, %2, %cst_7 [0] : vector<8x64xf32> to vector<64xf32>
    %6 = vector.shape_cast %5 : vector<64xf32> to vector<1x64xf32>
    %7 = arith.mulf %2, %2 : vector<8x64xf32>
    %cst_8 = arith.constant dense<0.000000e+00> : vector<64xf32>
    %8 = vector.multi_reduction <add>, %7, %cst_8 [0] : vector<8x64xf32> to vector<64xf32>
    %9 = vector.shape_cast %8 : vector<64xf32> to vector<1x64xf32>
    %cst_9 = arith.constant 1.250000e-01 : f32
    %10 = vector.broadcast %cst_9 : f32 to vector<1x64xf32>
    %11 = arith.mulf %6, %10 : vector<1x64xf32>
    %cst_10 = arith.constant 1.250000e-01 : f32
    %12 = vector.broadcast %cst_10 : f32 to vector<1x64xf32>
    %13 = arith.mulf %9, %12 : vector<1x64xf32>
    %14 = arith.mulf %11, %11 : vector<1x64xf32>
    %15 = arith.subf %13, %14 : vector<1x64xf32>
    %16 = vector.broadcast %11 : vector<1x64xf32> to vector<8x64xf32>
    %17 = arith.subf %2, %16 : vector<8x64xf32>
    %cst_11 = arith.constant 9.99999974E-6 : f32
    %18 = vector.broadcast %cst_11 : f32 to vector<1x64xf32>
    %19 = arith.addf %15, %18 : vector<1x64xf32>
    %20 = math.rsqrt %19 : vector<1x64xf32>
    %21 = vector.broadcast %20 : vector<1x64xf32> to vector<8x64xf32>
    %22 = arith.mulf %17, %21 : vector<8x64xf32>
    %23 = vector.broadcast %3 : vector<1x64xf32> to vector<8x64xf32>
    %24 = arith.mulf %22, %23 : vector<8x64xf32>
    %25 = vector.broadcast %4 : vector<1x64xf32> to vector<8x64xf32>
    %26 = arith.addf %24, %25 : vector<8x64xf32>
    %cst_12 = arith.constant 0.000000e+00 : f32
    %27 = vector.broadcast %cst_12 : f32 to vector<8x64xf32>
    %28 = arith.maximumf %26, %27 : vector<8x64xf32>
    %c0_13 = arith.constant 0 : index
    %c0_14 = arith.constant 0 : index
    %29 = vector.load %arg4[%c0_13, %c0_14] : memref<64x48xf32, #tpu.memory_space<vmem>>, vector<64x48xf32>
    %cst_15 = arith.constant dense<0.000000e+00> : vector<8x48xf32>
    %30 = tpu.matmul %28, %29, %cst_15 {dimension_numbers = #tpu.dot_dimension_numbers<[1], [0], [0], [1], [0, 0, 1, 1], [], []>} : vector<8x64xf32>, vector<64x48xf32>, vector<8x48xf32> -> vector<8x48xf32>
    %c0_16 = arith.constant 0 : index
    %c0_17 = arith.constant 0 : index
    %31 = vector.load %arg5[%c0_16, %c0_17] : memref<1x48xf32, #tpu.memory_space<vmem>>, vector<1x48xf32>
    %c0_18 = arith.constant 0 : index
    %c0_19 = arith.constant 0 : index
    %32 = vector.load %arg6[%c0_18, %c0_19] : memref<1x48xf32, #tpu.memory_space<vmem>>, vector<1x48xf32>
    %cst_20 = arith.constant dense<0.000000e+00> : vector<48xf32>
    %33 = vector.multi_reduction <add>, %30, %cst_20 [0] : vector<8x48xf32> to vector<48xf32>
    %34 = vector.shape_cast %33 : vector<48xf32> to vector<1x48xf32>
    %35 = arith.mulf %30, %30 : vector<8x48xf32>
    %cst_21 = arith.constant dense<0.000000e+00> : vector<48xf32>
    %36 = vector.multi_reduction <add>, %35, %cst_21 [0] : vector<8x48xf32> to vector<48xf32>
    %37 = vector.shape_cast %36 : vector<48xf32> to vector<1x48xf32>
    %cst_22 = arith.constant 1.250000e-01 : f32
    %38 = vector.broadcast %cst_22 : f32 to vector<1x48xf32>
    %39 = arith.mulf %34, %38 : vector<1x48xf32>
    %cst_23 = arith.constant 1.250000e-01 : f32
    %40 = vector.broadcast %cst_23 : f32 to vector<1x48xf32>
    %41 = arith.mulf %37, %40 : vector<1x48xf32>
    %42 = arith.mulf %39, %39 : vector<1x48xf32>
    %43 = arith.subf %41, %42 : vector<1x48xf32>
    %44 = vector.broadcast %39 : vector<1x48xf32> to vector<8x48xf32>
    %45 = arith.subf %30, %44 : vector<8x48xf32>
    %cst_24 = arith.constant 9.99999974E-6 : f32
    %46 = vector.broadcast %cst_24 : f32 to vector<1x48xf32>
    %47 = arith.addf %43, %46 : vector<1x48xf32>
    %48 = math.rsqrt %47 : vector<1x48xf32>
    %49 = vector.broadcast %48 : vector<1x48xf32> to vector<8x48xf32>
    %50 = arith.mulf %45, %49 : vector<8x48xf32>
    %51 = vector.broadcast %31 : vector<1x48xf32> to vector<8x48xf32>
    %52 = arith.mulf %50, %51 : vector<8x48xf32>
    %53 = vector.broadcast %32 : vector<1x48xf32> to vector<8x48xf32>
    %54 = arith.addf %52, %53 : vector<8x48xf32>
    %cst_25 = arith.constant 0.000000e+00 : f32
    %55 = vector.broadcast %cst_25 : f32 to vector<8x48xf32>
    %56 = arith.maximumf %54, %55 : vector<8x48xf32>
    %c0_26 = arith.constant 0 : index
    %c0_27 = arith.constant 0 : index
    %57 = vector.load %arg7[%c0_26, %c0_27] : memref<48x16xf32, #tpu.memory_space<vmem>>, vector<48x16xf32>
    %cst_28 = arith.constant dense<0.000000e+00> : vector<8x16xf32>
    %58 = tpu.matmul %56, %57, %cst_28 {dimension_numbers = #tpu.dot_dimension_numbers<[1], [0], [0], [1], [0, 0, 1, 1], [], []>} : vector<8x48xf32>, vector<48x16xf32>, vector<8x16xf32> -> vector<8x16xf32>
    %c0_29 = arith.constant 0 : index
    %c0_30 = arith.constant 0 : index
    %59 = vector.load %arg8[%c0_29, %c0_30] : memref<1x16xf32, #tpu.memory_space<vmem>>, vector<1x16xf32>
    %c0_31 = arith.constant 0 : index
    %c0_32 = arith.constant 0 : index
    %60 = vector.load %arg9[%c0_31, %c0_32] : memref<1x16xf32, #tpu.memory_space<vmem>>, vector<1x16xf32>
    %cst_33 = arith.constant dense<0.000000e+00> : vector<16xf32>
    %61 = vector.multi_reduction <add>, %58, %cst_33 [0] : vector<8x16xf32> to vector<16xf32>
    %62 = vector.shape_cast %61 : vector<16xf32> to vector<1x16xf32>
    %63 = arith.mulf %58, %58 : vector<8x16xf32>
    %cst_34 = arith.constant dense<0.000000e+00> : vector<16xf32>
    %64 = vector.multi_reduction <add>, %63, %cst_34 [0] : vector<8x16xf32> to vector<16xf32>
    %65 = vector.shape_cast %64 : vector<16xf32> to vector<1x16xf32>
    %cst_35 = arith.constant 1.250000e-01 : f32
    %66 = vector.broadcast %cst_35 : f32 to vector<1x16xf32>
    %67 = arith.mulf %62, %66 : vector<1x16xf32>
    %cst_36 = arith.constant 1.250000e-01 : f32
    %68 = vector.broadcast %cst_36 : f32 to vector<1x16xf32>
    %69 = arith.mulf %65, %68 : vector<1x16xf32>
    %70 = arith.mulf %67, %67 : vector<1x16xf32>
    %71 = arith.subf %69, %70 : vector<1x16xf32>
    %72 = vector.broadcast %67 : vector<1x16xf32> to vector<8x16xf32>
    %73 = arith.subf %58, %72 : vector<8x16xf32>
    %cst_37 = arith.constant 9.99999974E-6 : f32
    %74 = vector.broadcast %cst_37 : f32 to vector<1x16xf32>
    %75 = arith.addf %71, %74 : vector<1x16xf32>
    %76 = math.rsqrt %75 : vector<1x16xf32>
    %77 = vector.broadcast %76 : vector<1x16xf32> to vector<8x16xf32>
    %78 = arith.mulf %73, %77 : vector<8x16xf32>
    %79 = vector.broadcast %59 : vector<1x16xf32> to vector<8x16xf32>
    %80 = arith.mulf %78, %79 : vector<8x16xf32>
    %81 = vector.broadcast %60 : vector<1x16xf32> to vector<8x16xf32>
    %82 = arith.addf %80, %81 : vector<8x16xf32>
    %cst_38 = arith.constant 0.000000e+00 : f32
    %83 = vector.broadcast %cst_38 : f32 to vector<8x16xf32>
    %84 = arith.maximumf %82, %83 : vector<8x16xf32>
    %c0_39 = arith.constant 0 : index
    %c0_40 = arith.constant 0 : index
    %85 = vector.load %arg10[%c0_39, %c0_40] : memref<8x16xf32, #tpu.memory_space<vmem>>, vector<8x16xf32>
    tpu.vector_store %arg10[%c0_39, %c0_40], %84 {strides = array<i32>} : memref<8x16xf32, #tpu.memory_space<vmem>>, vector<8x16xf32>,
    return
  }
}

</mosaic_0001>

<llo_original>
// kernel: mlp_forward.1
$region0: #{mlp_forward.1}
  #allocation0 [shape = 'u32[]', space=smem, size = 0x4, offset = 0x4, fixed_abs, tag = 'smem constant byte address 0x4 - core index']
  #allocation1 [shape = 'u32[72,128]{1,0:T(1,128)}', space=vmem, size = 0x9000, scoped, tag = 'internal scratch']
  %s0 = inlined_call_operand.vmem [shape: f32[8,32], index: 0, kind: input, shape index: {}]
  %s1 = inlined_call_operand.vmem [shape: f32[32,64], index: 1, kind: input, shape index: {}]
  %s2 = inlined_call_operand.vmem [shape: f32[1,64], index: 2, kind: input, shape index: {}]
  %s3 = inlined_call_operand.vmem [shape: f32[1,64], index: 3, kind: input, shape index: {}]
  %s4 = inlined_call_operand.vmem [shape: f32[64,48], index: 4, kind: input, shape index: {}]
  %s5 = inlined_call_operand.vmem [shape: f32[1,48], index: 5, kind: input, shape index: {}]
  %s6 = inlined_call_operand.vmem [shape: f32[1,48], index: 6, kind: input, shape index: {}]
  %s7 = inlined_call_operand.vmem [shape: f32[48,16], index: 7, kind: input, shape index: {}]
  %s8 = inlined_call_operand.vmem [shape: f32[1,16], index: 8, kind: input, shape index: {}]
  %s9 = inlined_call_operand.vmem [shape: f32[1,16], index: 9, kind: input, shape index: {}]
  %s10 = inlined_call_operand.hbm [shape: f32[8,16], index: 10, kind: output, shape index: {}]
  %s11 = sld [smem:[#allocation0]]
  $region50: #{mlp_forward.1} parent=0
    _
  %s13 = ssub.s32 1, %s11
  %s14 = scalar_select 0, %s13, %s11
  $region1: #{mlp_forward.1} parent=0
    #allocation2 [shape = 'u8[4096]{0}', space=vmem, size = 0x1000, scoped, tag = 'output window, operand 0, single buffered']
    #allocation3 [shape = 's32[1]{0}', space=sflag, size = 0x4, scoped, tag = 'scoped memory for mlp_forward.1']
    %15 = vsyncpa [#allocation3], 0
    // Predicated region
    $region2: #{mlp_forward.1} parent=1 // pred_check
      _
    $region3: #{mlp_forward.1} parent=1 // pred_check_branch
      %17 = sbr.rel (0) target = $region5
    $region4: #{mlp_forward.1} parent=1 // pred_region
      _
    $region5: #{mlp_forward.1} parent=1 // pred_fallthru
      _
    // Predicated region
    $region6: #{mlp_forward.1} parent=1 // pred_check
      _
    $region7: #{mlp_forward.1} parent=1 // pred_check_branch
      %19 = sbr.rel (0) target = $region9
    $region8: #{mlp_forward.1} parent=1 // pred_region
      _
    $region9: #{mlp_forward.1} parent=1 // pred_fallthru
      _
    // Predicated region
    $region10: #{mlp_forward.1} parent=1 // pred_check
      _
    $region11: #{mlp_forward.1} parent=1 // pred_check_branch
      %21 = sbr.rel (0) target = $region13
    $region12: #{mlp_forward.1} parent=1 // pred_region
      _
    $region13: #{mlp_forward.1} parent=1 // pred_fallthru
      _
    // Predicated region
    $region14: #{mlp_forward.1} parent=1 // pred_check
      _
    $region15: #{mlp_forward.1} parent=1 // pred_check_branch
      %23 = sbr.rel (0) target = $region17
    $region16: #{mlp_forward.1} parent=1 // pred_region
      _
    $region17: #{mlp_forward.1} parent=1 // pred_fallthru
      _
    // Predicated region
    $region18: #{mlp_forward.1} parent=1 // pred_check
      _
    $region19: #{mlp_forward.1} parent=1 // pred_check_branch
      %25 = sbr.rel (0) target = $region21
    $region20: #{mlp_forward.1} parent=1 // pred_region
      _
    $region21: #{mlp_forward.1} parent=1 // pred_fallthru
      _
    // Predicated region
    $region22: #{mlp_forward.1} parent=1 // pred_check
      _
    $region23: #{mlp_forward.1} parent=1 // pred_check_branch
      %27 = sbr.rel (0) target = $region25
    $region24: #{mlp_forward.1} parent=1 // pred_region
      _
    $region25: #{mlp_forward.1} parent=1 // pred_fallthru
      _
    // Predicated region
    $region26: #{mlp_forward.1} parent=1 // pred_check
      _
    $region27: #{mlp_forward.1} parent=1 // pred_check_branch
      %29 = sbr.rel (0) target = $region29
    $region28: #{mlp_forward.1} parent=1 // pred_region
      _
    $region29: #{mlp_forward.1} parent=1 // pred_fallthru
      _
    // Predicated region
    $region30: #{mlp_forward.1} parent=1 // pred_check
      _
    $region31: #{mlp_forward.1} parent=1 // pred_check_branch
      %31 = sbr.rel (0) target = $region33
    $region32: #{mlp_forward.1} parent=1 // pred_region
      _
    $region33: #{mlp_forward.1} parent=1 // pred_fallthru
      _
    // Predicated region
    $region34: #{mlp_forward.1} parent=1 // pred_check
      _
    $region35: #{mlp_forward.1} parent=1 // pred_check_branch
      %33 = sbr.rel (0) target = $region37
    $region36: #{mlp_forward.1} parent=1 // pred_region
      _
    $region37: #{mlp_forward.1} parent=1 // pred_fallthru
      _
    // Predicated region
    $region38: #{mlp_forward.1} parent=1 // pred_check
      _
    $region39: #{mlp_forward.1} parent=1 // pred_check_branch
      %35 = sbr.rel (0) target = $region41
    $region40: #{mlp_forward.1} parent=1 // pred_region
      _
    $region41: #{mlp_forward.1} parent=1 // pred_fallthru
      _
    %v36 = vld [vmem:[%s0] sm:$0xff]
    %v37 = vld [vmem:[%s1] sm:$0xff]
    %v38 = vld [vmem:[%s1 + $0x8] sm:$0xff]
    %v39 = vld [vmem:[%s1 + $0x10] sm:$0xff]
    %v40 = vld [vmem:[%s1 + $0x18] sm:$0xff]
    %vm41 = vcmask 261120
    %v43 = vsel %vm41, %v36, 0
    %45 = vmatpush.msra.mxu0 0.0
    %46 = vmatpush.msra.mxu0 0.0
    %47 = vmatpush.msra.mxu0 0.0
    %48 = vmatpush.msra.mxu0 0.0
    %49 = vmatpush.msra.mxu0 0.0
    %50 = vmatpush.msra.mxu0 0.0
    %51 = vmatpush.msra.mxu0 0.0
    %52 = vmatpush.msra.mxu0 0.0
    %53 = vmatpush.msra.mxu0 0.0
    %54 = vmatpush.msra.mxu0 0.0
    %55 = vmatpush.msra.mxu0 0.0
    %56 = vmatpush.msra.mxu0 0.0
    %57 = vmatpush.msra.mxu0 %v40
    %58 = vmatpush.msra.mxu0 %v39
    %59 = vmatpush.msra.mxu0 %v38
    %60 = vmatpush.msra.mxu0 %v37
    %61 = vmatmul.f32.gmra.mxu0 %v43
    %v62 = vpop.f32.mrf.mxu0
    %v63 = vadd.f32 0.0, %v62
    %64 = vdwg.mxu0
    %v65 = vld [vmem:[%s2] sm:$0x1]
    %v66 = vld [vmem:[%s3] sm:$0x1]
    %vm67 = vcmask 523264
    %v68 = vsel %vm67, %v63, 0.0
    %v69 = vrot.slane %v68, 4
    %v70 = vadd.f32 %v68, %v69
    %v71 = vrot.slane %v70, 2
    %v72 = vadd.f32 %v70, %v71
    %v73 = vrot.slane %v72, 1
    %v74 = vadd.f32 %v72, %v73
    %v75 = vmul.f32 %v63, %v63
    %v76 = vsel %vm67, %v75, 0.0
    %v77 = vrot.slane %v76, 4
    %v78 = vadd.f32 %v76, %v77
    %v79 = vrot.slane %v78, 2
    %v80 = vadd.f32 %v78, %v79
    %v81 = vrot.slane %v80, 1
    %v82 = vadd.f32 %v80, %v81
    %v83 = vmul.f32 %v74, 0.125
    %v84 = vmul.f32 %v82, 0.125
    %v85 = vmul.f32 %v83, %v83
    %v86 = vsub.f32 %v84, %v85
    %v87 = vsub.f32 %v63, %v83
    %v88 = vadd.f32 %v86, 1e-05
    %v89 = vrsqrt.pop %v88
    %v90 = vmul.f32 %v89, %v88
    %v91 = vmul.f32 %v90, %v89
    %v92 = vmul.f32 0.5, %v91
    %v93 = vsub.f32 1.5, %v92
    %v94 = vmul.f32 %v89, %v93
    %vm95 = vweird.f32 %v88
    %vm96 = vweird.f32 %v89
    %vm97 = vmor %vm95, %vm96
    %v98 = vsel %vm97, %v89, %v94
    %v99 = vmul.f32 %v87, %v98
    %v101 = vperm.slane %v65, 0
    %v103 = vmul.f32 %v99, %v101
    %v105 = vperm.slane %v66, 0
    %v107 = vadd.f32 %v103, %v105
    %v108 = vmax.f32 %v107, 0.0
    %v109 = vld [vmem:[%s4] sm:$0xff]
    %v110 = vld [vmem:[%s4 + $0x8] sm:$0xff]
    %v111 = vld [vmem:[%s4 + $0x10] sm:$0xff]
    %v112 = vld [vmem:[%s4 + $0x18] sm:$0xff]
    %v113 = vld [vmem:[%s4 + $0x20] sm:$0xff]
    %v114 = vld [vmem:[%s4 + $0x28] sm:$0xff]
    %v115 = vld [vmem:[%s4 + $0x30] sm:$0xff]
    %v116 = vld [vmem:[%s4 + $0x38] sm:$0xff]
    %v118 = vsel %vm67, %v108, 0
    %120 = vmatpush.msra.mxu0 0.0
    %121 = vmatpush.msra.mxu0 0.0
    %122 = vmatpush.msra.mxu0 0.0
    %123 = vmatpush.msra.mxu0 0.0
    %124 = vmatpush.msra.mxu0 0.0
    %125 = vmatpush.msra.mxu0 0.0
    %126 = vmatpush.msra.mxu0 0.0
    %127 = vmatpush.msra.mxu0 0.0
    %128 = vmatpush.msra.mxu0 %v116
    %129 = vmatpush.msra.mxu0 %v115
    %130 = vmatpush.msra.mxu0 %v114
    %131 = vmatpush.msra.mxu0 %v113
    %132 = vmatpush.msra.mxu0 %v112
    %133 = vmatpush.msra.mxu0 %v111
    %134 = vmatpush.msra.mxu0 %v110
    %135 = vmatpush.msra.mxu0 %v109
    %136 = vmatmul.f32.gmra.mxu0 %v118
    %v137 = vpop.f32.mrf.mxu0
    %v138 = vadd.f32 0.0, %v137
    %139 = vdwg.mxu0
    %v140 = vld [vmem:[%s5] sm:$0x1]
    %v141 = vld [vmem:[%s6] sm:$0x1]
    %vm142 = vcmask 392192
    %v143 = vsel %vm142, %v138, 0.0
    %v144 = vrot.slane %v143, 4
    %v145 = vadd.f32 %v143, %v144
    %v146 = vrot.slane %v145, 2
    %v147 = vadd.f32 %v145, %v146
    %v148 = vrot.slane %v147, 1
    %v149 = vadd.f32 %v147, %v148
    %v150 = vmul.f32 %v138, %v138
    %v151 = vsel %vm142, %v150, 0.0
    %v152 = vrot.slane %v151, 4
    %v153 = vadd.f32 %v151, %v152
    %v154 = vrot.slane %v153, 2
    %v155 = vadd.f32 %v153, %v154
    %v156 = vrot.slane %v155, 1
    %v157 = vadd.f32 %v155, %v156
    %v158 = vmul.f32 %v149, 0.125
    %v159 = vmul.f32 %v157, 0.125
    %v160 = vmul.f32 %v158, %v158
    %v161 = vsub.f32 %v159, %v160
    %v162 = vsub.f32 %v138, %v158
    %v163 = vadd.f32 %v161, 1e-05
    %v164 = vrsqrt.pop %v163
    %v165 = vmul.f32 %v164, %v163
    %v166 = vmul.f32 %v165, %v164
    %v167 = vmul.f32 0.5, %v166
    %v168 = vsub.f32 1.5, %v167
    %v169 = vmul.f32 %v164, %v168
    %vm170 = vweird.f32 %v163
    %vm171 = vweird.f32 %v164
    %vm172 = vmor %vm170, %vm171
    %v173 = vsel %vm172, %v164, %v169
    %v174 = vmul.f32 %v162, %v173
    %v176 = vperm.slane %v140, 0
    %v178 = vmul.f32 %v174, %v176
    %v180 = vperm.slane %v141, 0
    %v182 = vadd.f32 %v178, %v180
    %v183 = vmax.f32 %v182, 0.0
    %v184 = vld [vmem:[%s7] sm:$0xff]
    %v185 = vld [vmem:[%s7 + $0x8] sm:$0xff]
    %v186 = vld [vmem:[%s7 + $0x10] sm:$0xff]
    %v187 = vld [vmem:[%s7 + $0x18] sm:$0xff]
    %v188 = vld [vmem:[%s7 + $0x20] sm:$0xff]
    %v189 = vld [vmem:[%s7 + $0x28] sm:$0xff]
    %v191 = vsel %vm142, %v183, 0
    %193 = vmatpush.msra.mxu0 0.0
    %194 = vmatpush.msra.mxu0 0.0
    %195 = vmatpush.msra.mxu0 0.0
    %196 = vmatpush.msra.mxu0 0.0
    %197 = vmatpush.msra.mxu0 0.0
    %198 = vmatpush.msra.mxu0 0.0
    %199 = vmatpush.msra.mxu0 0.0
    %200 = vmatpush.msra.mxu0 0.0
    %201 = vmatpush.msra.mxu0 0.0
    %202 = vmatpush.msra.mxu0 0.0
    %203 = vmatpush.msra.mxu0 %v189
    %204 = vmatpush.msra.mxu0 %v188
    %205 = vmatpush.msra.mxu0 %v187
    %206 = vmatpush.msra.mxu0 %v186
    %207 = vmatpush.msra.mxu0 %v185
    %208 = vmatpush.msra.mxu0 %v184
    %209 = vmatmul.f32.gmra.mxu0 %v191
    %v210 = vpop.f32.mrf.mxu0
    %v211 = vadd.f32 0.0, %v210
    %212 = vdwg.mxu0
    %v213 = vld [vmem:[%s8] sm:$0x1]
    %v214 = vld [vmem:[%s9] sm:$0x1]
    %vm215 = vcmask 130048
    %v216 = vsel %vm215, %v211, 0.0
    %v217 = vrot.slane %v216, 4
    %v218 = vadd.f32 %v216, %v217
    %v219 = vrot.slane %v218, 2
    %v220 = vadd.f32 %v218, %v219
    %v221 = vrot.slane %v220, 1
    %v222 = vadd.f32 %v220, %v221
    %v223 = vmul.f32 %v211, %v211
    %v224 = vsel %vm215, %v223, 0.0
    %v225 = vrot.slane %v224, 4
    %v226 = vadd.f32 %v224, %v225
    %v227 = vrot.slane %v226, 2
    %v228 = vadd.f32 %v226, %v227
    %v229 = vrot.slane %v228, 1
    %v230 = vadd.f32 %v228, %v229
    %v231 = vmul.f32 %v222, 0.125
    %v232 = vmul.f32 %v230, 0.125
    %v233 = vmul.f32 %v231, %v231
    %v234 = vsub.f32 %v232, %v233
    %v235 = vsub.f32 %v211, %v231
    %v236 = vadd.f32 %v234, 1e-05
    %v237 = vrsqrt.pop %v236
    %v238 = vmul.f32 %v237, %v236
    %v239 = vmul.f32 %v238, %v237
    %v240 = vmul.f32 0.5, %v239
    %v241 = vsub.f32 1.5, %v240
    %v242 = vmul.f32 %v237, %v241
    %vm243 = vweird.f32 %v236
    %vm244 = vweird.f32 %v237
    %vm245 = vmor %vm243, %vm244
    %v246 = vsel %vm245, %v237, %v242
    %v247 = vmul.f32 %v235, %v246
    %v249 = vperm.slane %v213, 0
    %v251 = vmul.f32 %v247, %v249
    %v253 = vperm.slane %v214, 0
    %v255 = vadd.f32 %v251, %v253
    %v256 = vmax.f32 %v255, 0.0
    %257 = vst.msk [vmem:[#allocation2] sm:$0xff] %vm215, %v256
    // Predicated region
    $region42: #{mlp_forward.1} parent=1 // pred_check
      _
    $region43: #{mlp_forward.1} parent=1 // pred_check_branch
      %259 = sbr.rel (0) target = $region45
    $region44: #{mlp_forward.1} parent=1 // pred_region
      %261 = vsyncadd [#allocation3], 0
      %s263 = sshll.u32 [#allocation2], 4
      %s264 = int_to_ptr.vmem [resolvable:$true] %s263
      %s265 = sshll.u32 %s10, 4
      %s266 = int_to_ptr.hbm [resolvable:$true] %s265
      %268 = dma.vmem_to_hbm [thread:$0]  %s264, 128, %s266, [#allocation3]
    $region45: #{mlp_forward.1} parent=1 // pred_fallthru
      _
    // Predicated region
    $region46: #{mlp_forward.1} parent=1 // pred_check
      _
    $region47: #{mlp_forward.1} parent=1 // pred_check_branch
      %270 = sbr.rel (0) target = $region49
    $region48: #{mlp_forward.1} parent=1 // pred_region
      %272 = dma.done [#allocation3], 128
    $region49: #{mlp_forward.1} parent=1 // pred_fallthru
      _
    %273 = vsyncpa [#allocation3], 1

</llo_original>
